<compile_context>
chip_gen: v5e
topology: v5e:2x2
jax: 0.10.0
libtpu: 0.0.40
codegen_flags: <defaults>
</compile_context>

<pallas_src>
import numpy as np
import jax
import jax.numpy as jnp
from jax.experimental import pallas as pl
from jax.experimental.pallas import tpu as pltpu

# Module constants (InteractionModeNet1D with the config above).
K = 3                     # conv kernel size
H = W = 16                # spatial input size (in_nodes)
HO = H - K + 1            # 14 : 'valid' conv output size
P = (HO - 2) // 2 + 1     # 7  : maxpool(2, 2) output size
P_PAD = 8                 # pooled-row stride in the compact lane layout
CH_LANES = P_PAD * P_PAD  # 64 lanes per conv output channel (49 valid)
NTAPS = 4                 # 2x2 maxpool taps folded into the banded matrix


def fused_forward_kernel(x_ref, s_ref, bc_ref, w1_ref, b1_ref, w2_ref, b2_ref,
                         o_ref):
    """Conv+ReLU+BN(eval)+MaxPool+Linear+ReLU+Linear+log_softmax, fused.

    x_ref  : (NB, Cin*H*W)        f32 VMEM  flattened NCHW image (no padding)
    s_ref  : (Cin*H*W, 4*featw)   f32 VMEM  banded conv/pool-tap/gather matrix
    bc_ref : (1, featw)           f32 VMEM  conv bias (BN scale folded) slab
    w1_ref : (featw, H1)          f32 VMEM  dense-1 weights on compact lanes
    b1_ref : (1, H1)              f32 VMEM  dense-1 bias (BN shift folded in)
    w2_ref : (H1, C)              f32 VMEM
    b2_ref : (1, C)               f32 VMEM
    o_ref  : (NB, C)              f32 VMEM  log-probabilities
    """
    featw = bc_ref.shape[1]

    # Conv3x3 * BN-scale, im2col shifts, 2x2-pool tap expansion and the
    # flatten-gather are all baked into s_ref -> one MXU matmul.
    acc = jnp.dot(x_ref[...], s_ref[...],
                  preferred_element_type=jnp.float32)        # (NB, 4*featw)

    # MaxPool2d(2,2): max over the four 128-aligned tap chunks (VPU only).
    # Pooling raw (scale-folded) conv outputs first is exact because bias and
    # ReLU are monotone and the BN scale is positive.
    pooled = jnp.maximum(
        jnp.maximum(acc[:, 0 * featw:1 * featw], acc[:, 1 * featw:2 * featw]),
        jnp.maximum(acc[:, 2 * featw:3 * featw], acc[:, 3 * featw:4 * featw]))

    # conv bias (scale-folded) + ReLU. The post-ReLU BN shift is folded into b1.
    feat = jnp.maximum(pooled + bc_ref[...], 0.0)            # (NB, featw)

    # Dense 1 + ReLU (flatten/gather already folded into w1 via the lane layout).
    h = jnp.dot(feat, w1_ref[...], preferred_element_type=jnp.float32) + b1_ref[...]
    h = jnp.maximum(h, 0.0)
    # TODO(synk): Dropout is identity in eval mode; train-mode Bernoulli masking not implemented.

    # Dense 2 + log_softmax.
    z = jnp.dot(h, w2_ref[...], preferred_element_type=jnp.float32) + b2_ref[...]
    m = jnp.max(z, axis=-1, keepdims=True)
    lse = m + jnp.log(jnp.sum(jnp.exp(z - m), axis=-1, keepdims=True))
    o_ref[...] = z - lse


def prepare_params(params):
    """One-time host-side parameter prep for the fused kernel."""
    wconv, bconv, bn_scale, bn_shift, w1, b1, w2, b2 = map(np.asarray, params)
    Cout, Cin = wconv.shape[0], wconv.shape[1]
    hidden = w1.shape[1]
    out_nodes = w2.shape[1]
    featw = Cout * CH_LANES

    # Fold eval-mode BN scale across the ReLU into the conv weights/bias:
    #   relu(conv + b) * s + t == relu(conv*s + b*s) + t, valid for s > 0.
    assert np.all(bn_scale > 0), "BN scale must be > 0 to fold across ReLU/max"
    wc = wconv * bn_scale[:, None, None, None]      # (Cout, Cin, K, K)
    bc = bconv * bn_scale                           # (Cout,)

    # Banded shift-and-scale matrix folding conv taps + pool taps + gather.
    # Column layout: col = tap*featw + o*CH_LANES + pi*P_PAD + pj.
    S = np.zeros((Cin * H * W, NTAPS * featw), np.float32)
    for o in range(Cout):
        for ci in range(Cin):
            for pi in range(P):
                for pj in range(P):
                    col_base = o * CH_LANES + pi * P_PAD + pj
                    for di in range(2):
                        for dj in range(2):
                            col = (di * 2 + dj) * featw + col_base
                            for kh in range(K):
                                for kw in range(K):
                                    r = 2 * pi + di + kh
                                    c = 2 * pj + dj + kw
                                    S[ci * H * W + r * W + c, col] += wc[o, ci, kh, kw]

    # Conv-bias slab, W1 scatter (PyTorch flatten order o*P*P + pi*P + pj) and
    # BN-shift slab on the compact pooled lane layout.
    bc_slab = np.zeros((1, featw), np.float32)
    w1s = np.zeros((featw, hidden), np.float32)
    t_slab = np.zeros((featw,), np.float32)
    for o in range(Cout):
        for pi in range(P):
            for pj in range(P):
                dst = o * CH_LANES + pi * P_PAD + pj
                src = o * P * P + pi * P + pj
                bc_slab[0, dst] = bc[o]
                w1s[dst] = w1[src]
                t_slab[dst] = bn_shift[o]

    # Fold the post-ReLU BN shift into the first dense bias.
    b1p = b1 + t_slab @ w1s

    return tuple(jnp.asarray(a) for a in
                 (S, bc_slab, w1s, b1p.reshape(1, hidden),
                  w2, b2.reshape(1, out_nodes)))


def interaction_mode_net_forward(x, kparams, *, block_n=None):
    """Full forward pass. x: (N, Cin, 16, 16) NCHW float32."""
    S, bc_slab, w1s, b1, w2, b2 = kparams
    N, Cin, Hx, Wx = x.shape
    assert (Hx, Wx) == (H, W)
    inw = Cin * H * W
    assert S.shape[0] == inw
    featw = bc_slab.shape[1]
    hidden = w1s.shape[1]
    out_nodes = w2.shape[1]

    # No HBM padding: pure reshape of the NCHW input to (N, Cin*H*W).
    x_flat = x.reshape(N, inw)

    # Batch tiling: block_n must be a multiple of 8 (f32 sublanes) or == N.
    # Keep >= 2 grid steps when possible (v7x megacore), blocks up to 1024 rows.
    if block_n is None:
        if N <= 8:
            block_n = N
        else:
            block_n = min(1024, ((pl.cdiv(N, 2) + 7) // 8) * 8)
    assert block_n == N or block_n % 8 == 0, "block_n must be ==N or a multiple of 8"
    grid = (pl.cdiv(N, block_n),)

    return pl.pallas_call(
        fused_forward_kernel,
        out_shape=jax.ShapeDtypeStruct((N, out_nodes), jnp.float32),
        grid=grid,
        in_specs=[
            pl.BlockSpec((block_n, inw), lambda i: (i, 0)),
            pl.BlockSpec((inw, NTAPS * featw), lambda i: (0, 0)),
            pl.BlockSpec((1, featw), lambda i: (0, 0)),
            pl.BlockSpec((featw, hidden), lambda i: (0, 0)),
            pl.BlockSpec((1, hidden), lambda i: (0, 0)),
            pl.BlockSpec((hidden, out_nodes), lambda i: (0, 0)),
            pl.BlockSpec((1, out_nodes), lambda i: (0, 0)),
        ],
        out_specs=pl.BlockSpec((block_n, out_nodes), lambda i: (i, 0)),
        compiler_params=pltpu.CompilerParams(
            dimension_semantics=("parallel",),
            vmem_limit_bytes=64 * 1024 * 1024),
    )(x_flat, S, bc_slab, w1s, b1, w2, b2)


def reference_forward(x, params):
    """Pure-JAX reference for correctness checking."""
    wconv, bconv, bn_scale, bn_shift, w1, b1, w2, b2 = params
    N = x.shape[0]
    Cout = wconv.shape[0]
    y = jax.lax.conv_general_dilated(
        x, wconv, window_strides=(1, 1), padding='VALID',
        dimension_numbers=('NCHW', 'OIHW', 'NCHW'))
    y = y + bconv.reshape(1, Cout, 1, 1)
    y = jnp.maximum(y, 0.0)
    y = y * bn_scale.reshape(1, Cout, 1, 1) + bn_shift.reshape(1, Cout, 1, 1)
    y = jax.lax.reduce_window(y, -jnp.inf, jax.lax.max,
                              (1, 1, 2, 2), (1, 1, 2, 2), 'VALID')
    f = y.reshape(N, -1)
    h = jnp.maximum(f @ w1 + b1, 0.0)
    z = h @ w2 + b2
    return jax.nn.log_softmax(z, axis=1)


def make_params(key, Cin=1, Cout=4, hidden=32, out_nodes=2):
    """Deterministic parameter init matching InteractionNet.__initialize_weights."""
    F = Cout * P * P
    k1, k2, k3 = jax.random.split(key, 3)
    fan_out = Cout * K * K
    wconv = jax.random.normal(k1, (Cout, Cin, K, K), jnp.float32) * jnp.sqrt(2.0 / fan_out)
    bconv = jnp.zeros((Cout,), jnp.float32)
    # BatchNorm2d eval with init stats (mean=0, var=1, gamma=1, beta=0).
    eps = 1e-5
    bn_scale = jnp.full((Cout,), 1.0 / jnp.sqrt(1.0 + eps), jnp.float32)
    bn_shift = jnp.zeros((Cout,), jnp.float32)
    w1 = jax.random.normal(k2, (F, hidden), jnp.float32) * 0.01
    b1 = jnp.zeros((hidden,), jnp.float32)
    w2 = jax.random.normal(k3, (hidden, out_nodes), jnp.float32) * 0.01
    b2 = jnp.zeros((out_nodes,), jnp.float32)
    return (wconv, bconv, bn_scale, bn_shift, w1, b1, w2, b2)


if __name__ == "__main__":
    key = jax.random.PRNGKey(0)
    kp, kx = jax.random.split(key)
    params = make_params(kp, Cin=1, Cout=4, hidden=32, out_nodes=2)
    kparams = prepare_params(params)

    # Input matches PyTorch NCHW convention: (batch=2, channels=1, 16, 16).
    x = jax.random.normal(kx, (2, 1, H, W), jnp.float32)

    fwd = jax.jit(interaction_mode_net_forward)
    out = jax.block_until_ready(fwd(x, kparams))

    ref = jax.block_until_ready(reference_forward(x, params))
    assert out.shape == (2, 2), out.shape
    assert jnp.allclose(out, ref, atol=1e-4, rtol=1e-4), (out, ref)

    print("KERNEL_OK")
</pallas_src>

<mosaic_0001>
module attributes {stable_mosaic.version = 11 : i64} {
  func.func @fused_forward_kernel(%arg0: i32, %arg1: memref<2x256xf32, #tpu.memory_space<vmem>>, %arg2: memref<256x1024xf32, #tpu.memory_space<vmem>>, %arg3: memref<1x256xf32, #tpu.memory_space<vmem>>, %arg4: memref<256x32xf32, #tpu.memory_space<vmem>>, %arg5: memref<1x32xf32, #tpu.memory_space<vmem>>, %arg6: memref<32x2xf32, #tpu.memory_space<vmem>>, %arg7: memref<1x2xf32, #tpu.memory_space<vmem>>, %arg8: memref<2x2xf32, #tpu.memory_space<vmem>>) attributes {dimension_semantics = [#tpu.dimension_semantics<parallel>], iteration_bounds = array<i64: 1>, scalar_prefetch = 0 : i64, scratch_operands = 0 : i64, tpu.core_type = #tpu.core_type<tc>, window_params = [{transform_indices = @transform_0, window_bounds = array<i64: 2, 256>}, {pipeline_mode = #tpu.pipeline_mode<synchronous>, transform_indices = @transform_1, window_bounds = array<i64: 256, 1024>}, {pipeline_mode = #tpu.pipeline_mode<synchronous>, transform_indices = @transform_2, window_bounds = array<i64: 1, 256>}, {pipeline_mode = #tpu.pipeline_mode<synchronous>, transform_indices = @transform_3, window_bounds = array<i64: 256, 32>}, {pipeline_mode = #tpu.pipeline_mode<synchronous>, transform_indices = @transform_4, window_bounds = array<i64: 1, 32>}, {pipeline_mode = #tpu.pipeline_mode<synchronous>, transform_indices = @transform_5, window_bounds = array<i64: 32, 2>}, {pipeline_mode = #tpu.pipeline_mode<synchronous>, transform_indices = @transform_6, window_bounds = array<i64: 1, 2>}, {transform_indices = @transform_7, window_bounds = array<i64: 2, 2>}]} {
    %c0 = arith.constant 0 : index
    %c0_0 = arith.constant 0 : index
    %0 = vector.load %arg1[%c0, %c0_0] : memref<2x256xf32, #tpu.memory_space<vmem>>, vector<2x256xf32>
    %c0_1 = arith.constant 0 : index
    %c0_2 = arith.constant 0 : index
    %1 = vector.load %arg2[%c0_1, %c0_2] : memref<256x1024xf32, #tpu.memory_space<vmem>>, vector<256x1024xf32>
    %cst = arith.constant dense<0.000000e+00> : vector<2x1024xf32>
    %2 = tpu.matmul %0, %1, %cst {dimension_numbers = #tpu.dot_dimension_numbers<[1], [0], [0], [1], [0, 0, 1, 1], [], []>} : vector<2x256xf32>, vector<256x1024xf32>, vector<2x1024xf32> -> vector<2x1024xf32>
    %3 = vector.extract_strided_slice %2 {offsets = [0, 0], sizes = [2, 256], strides = [1, 1]} : vector<2x1024xf32> to vector<2x256xf32>
    %4 = vector.extract_strided_slice %2 {offsets = [0, 256], sizes = [2, 256], strides = [1, 1]} : vector<2x1024xf32> to vector<2x256xf32>
    %5 = arith.maximumf %3, %4 : vector<2x256xf32>
    %6 = vector.extract_strided_slice %2 {offsets = [0, 512], sizes = [2, 256], strides = [1, 1]} : vector<2x1024xf32> to vector<2x256xf32>
    %7 = vector.extract_strided_slice %2 {offsets = [0, 768], sizes = [2, 256], strides = [1, 1]} : vector<2x1024xf32> to vector<2x256xf32>
    %8 = arith.maximumf %6, %7 : vector<2x256xf32>
    %9 = arith.maximumf %5, %8 : vector<2x256xf32>
    %c0_3 = arith.constant 0 : index
    %c0_4 = arith.constant 0 : index
    %10 = vector.load %arg3[%c0_3, %c0_4] : memref<1x256xf32, #tpu.memory_space<vmem>>, vector<1x256xf32>
    %11 = vector.broadcast %10 : vector<1x256xf32> to vector<2x256xf32>
    %12 = arith.addf %9, %11 : vector<2x256xf32>
    %cst_5 = arith.constant 0.000000e+00 : f32
    %13 = vector.broadcast %cst_5 : f32 to vector<2x256xf32>
    %14 = arith.maximumf %12, %13 : vector<2x256xf32>
    %c0_6 = arith.constant 0 : index
    %c0_7 = arith.constant 0 : index
    %15 = vector.load %arg4[%c0_6, %c0_7] : memref<256x32xf32, #tpu.memory_space<vmem>>, vector<256x32xf32>
    %cst_8 = arith.constant dense<0.000000e+00> : vector<2x32xf32>
    %16 = tpu.matmul %14, %15, %cst_8 {dimension_numbers = #tpu.dot_dimension_numbers<[1], [0], [0], [1], [0, 0, 1, 1], [], []>} : vector<2x256xf32>, vector<256x32xf32>, vector<2x32xf32> -> vector<2x32xf32>
    %c0_9 = arith.constant 0 : index
    %c0_10 = arith.constant 0 : index
    %17 = vector.load %arg5[%c0_9, %c0_10] : memref<1x32xf32, #tpu.memory_space<vmem>>, vector<1x32xf32>
    %18 = vector.broadcast %17 : vector<1x32xf32> to vector<2x32xf32>
    %19 = arith.addf %16, %18 : vector<2x32xf32>
    %cst_11 = arith.constant 0.000000e+00 : f32
    %20 = vector.broadcast %cst_11 : f32 to vector<2x32xf32>
    %21 = arith.maximumf %19, %20 : vector<2x32xf32>
    %c0_12 = arith.constant 0 : index
    %c0_13 = arith.constant 0 : index
    %22 = vector.load %arg6[%c0_12, %c0_13] : memref<32x2xf32, #tpu.memory_space<vmem>>, vector<32x2xf32>
    %cst_14 = arith.constant dense<0.000000e+00> : vector<2x2xf32>
    %23 = tpu.matmul %21, %22, %cst_14 {dimension_numbers = #tpu.dot_dimension_numbers<[1], [0], [0], [1], [0, 0, 1, 1], [], []>} : vector<2x32xf32>, vector<32x2xf32>, vector<2x2xf32> -> vector<2x2xf32>
    %c0_15 = arith.constant 0 : index
    %c0_16 = arith.constant 0 : index
    %24 = vector.load %arg7[%c0_15, %c0_16] : memref<1x2xf32, #tpu.memory_space<vmem>>, vector<1x2xf32>
    %25 = vector.broadcast %24 : vector<1x2xf32> to vector<2x2xf32>
    %26 = arith.addf %23, %25 : vector<2x2xf32>
    %cst_17 = arith.constant dense<0xFF800000> : vector<2xf32>
    %27 = vector.multi_reduction <maximumf>, %26, %cst_17 [1] : vector<2x2xf32> to vector<2xf32>
    %28 = vector.shape_cast %27 : vector<2xf32> to vector<2x1xf32>
    %29 = vector.broadcast %28 : vector<2x1xf32> to vector<2x2xf32>
    %30 = arith.subf %26, %29 : vector<2x2xf32>
    %31 = math.exp %30 : vector<2x2xf32>
    %cst_18 = arith.constant dense<0.000000e+00> : vector<2xf32>
    %32 = vector.multi_reduction <add>, %31, %cst_18 [1] : vector<2x2xf32> to vector<2xf32>
    %33 = vector.shape_cast %32 : vector<2xf32> to vector<2x1xf32>
    %34 = math.log %33 : vector<2x1xf32>
    %35 = arith.addf %28, %34 : vector<2x1xf32>
    %36 = vector.broadcast %35 : vector<2x1xf32> to vector<2x2xf32>
    %37 = arith.subf %26, %36 : vector<2x2xf32>
    %c0_19 = arith.constant 0 : index
    %c0_20 = arith.constant 0 : index
    %38 = vector.load %arg8[%c0_19, %c0_20] : memref<2x2xf32, #tpu.memory_space<vmem>>, vector<2x2xf32>
    tpu.vector_store %arg8[%c0_19, %c0_20], %37 {strides = array<i32>} : memref<2x2xf32, #tpu.memory_space<vmem>>, vector<2x2xf32>,
    return
  }
  func.func @transform_0(%arg0: i32) -> (i32, i32) {
    %c0_i32 = arith.constant 0 : i32
    %c0_i32_0 = arith.constant 0 : i32
    return %arg0, %c0_i32 : i32, i32
  }
  func.func @transform_1(%arg0: i32) -> (i32, i32) {
    %c0_i32 = arith.constant 0 : i32
    %c0_i32_0 = arith.constant 0 : i32
    %c0_i32_1 = arith.constant 0 : i32
    return %c0_i32, %c0_i32_0 : i32, i32
  }
  func.func @transform_2(%arg0: i32) -> (i32, i32) {
    %c0_i32 = arith.constant 0 : i32
    %c0_i32_0 = arith.constant 0 : i32
    %c0_i32_1 = arith.constant 0 : i32
    return %c0_i32, %c0_i32_0 : i32, i32
  }
  func.func @transform_3(%arg0: i32) -> (i32, i32) {
    %c0_i32 = arith.constant 0 : i32
    %c0_i32_0 = arith.constant 0 : i32
    %c0_i32_1 = arith.constant 0 : i32
    return %c0_i32, %c0_i32_0 : i32, i32
  }
  func.func @transform_4(%arg0: i32) -> (i32, i32) {
    %c0_i32 = arith.constant 0 : i32
    %c0_i32_0 = arith.constant 0 : i32
    %c0_i32_1 = arith.constant 0 : i32
    return %c0_i32, %c0_i32_0 : i32, i32
  }
  func.func @transform_5(%arg0: i32) -> (i32, i32) {
    %c0_i32 = arith.constant 0 : i32
    %c0_i32_0 = arith.constant 0 : i32
    %c0_i32_1 = arith.constant 0 : i32
    return %c0_i32, %c0_i32_0 : i32, i32
  }
  func.func @transform_6(%arg0: i32) -> (i32, i32) {
    %c0_i32 = arith.constant 0 : i32
    %c0_i32_0 = arith.constant 0 : i32
    %c0_i32_1 = arith.constant 0 : i32
    return %c0_i32, %c0_i32_0 : i32, i32
  }
  func.func @transform_7(%arg0: i32) -> (i32, i32) {
    %c0_i32 = arith.constant 0 : i32
    %c0_i32_0 = arith.constant 0 : i32
    return %arg0, %c0_i32 : i32, i32
  }
}

</mosaic_0001>

<llo_original>
// kernel: interaction_mode_net_forward.1
$region0: #{interaction_mode_net_forward.1}
  #allocation0 [shape = 'u32[]', space=smem, size = 0x4, offset = 0x4, fixed_abs, tag = 'smem constant byte address 0x4 - core index']
  #allocation1 [shape = 'u32[72,128]{1,0:T(1,128)}', space=vmem, size = 0x9000, scoped, tag = 'internal scratch']
  %s0 = inlined_call_operand.vmem [shape: f32[2,256], index: 0, kind: input, shape index: {}]
  %s1 = inlined_call_operand.hbm [shape: f32[256,1024], index: 1, kind: input, shape index: {}]
  %s2 = inlined_call_operand.vmem [shape: f32[1,256], index: 2, kind: input, shape index: {}]
  %s3 = inlined_call_operand.vmem [shape: f32[256,32], index: 3, kind: input, shape index: {}]
  %s4 = inlined_call_operand.vmem [shape: f32[1,32], index: 4, kind: input, shape index: {}]
  %s5 = inlined_call_operand.vmem [shape: f32[32,2], index: 5, kind: input, shape index: {}]
  %s6 = inlined_call_operand.vmem [shape: f32[1,2], index: 6, kind: input, shape index: {}]
  %s7 = inlined_call_operand.hbm [shape: f32[2,2], index: 7, kind: output, shape index: {}]
  %s8 = sld [smem:[#allocation0]]
  $region42: #{interaction_mode_net_forward.1} parent=0
    _
  %s10 = ssub.s32 1, %s8
  %s11 = scalar_select 0, %s10, %s8
  $region1: #{interaction_mode_net_forward.1} parent=0
    #allocation2 [shape = 'u8[1048576]{0}', space=vmem, size = 0x100000, scoped, tag = 'input window, operand 1, single buffered']
    #allocation3 [shape = 's32[1]{0}', space=sflag, size = 0x4, scoped, tag = 'scoped memory for interaction_mode_net_forward.1']
    #allocation4 [shape = 's32[1]{0}', space=sflag, size = 0x4, scoped, tag = 'scoped memory for interaction_mode_net_forward.1']
    #allocation5 [shape = 'u8[1024]{0}', space=vmem, size = 0x400, scoped, tag = 'output window, operand 0, single buffered']
    %12 = vsyncpa [#allocation3], 0
    %13 = vsyncpa [#allocation4], 0
    // Predicated region
    $region2: #{interaction_mode_net_forward.1} parent=1 // pred_check
      _
    $region3: #{interaction_mode_net_forward.1} parent=1 // pred_check_branch
      %15 = sbr.rel (0) target = $region5
    $region4: #{interaction_mode_net_forward.1} parent=1 // pred_region
      _
    $region5: #{interaction_mode_net_forward.1} parent=1 // pred_fallthru
      _
    // Predicated region
    $region6: #{interaction_mode_net_forward.1} parent=1 // pred_check
      _
    $region7: #{interaction_mode_net_forward.1} parent=1 // pred_check_branch
      %17 = sbr.rel (0) target = $region9
    $region8: #{interaction_mode_net_forward.1} parent=1 // pred_region
      %19 = vsyncadd [#allocation3], 0
      %s20 = sshll.u32 %s1, 4
      %s21 = int_to_ptr.hbm [resolvable:$true] %s20
      %s22 = sshll.u32 [#allocation2], 4
      %s23 = int_to_ptr.vmem [resolvable:$true] %s22
      %28 = dma.hbm_to_vmem [thread:$0]  %s21, 32768, %s23, [#allocation3], 1024, 1024, 64
    $region9: #{interaction_mode_net_forward.1} parent=1 // pred_fallthru
      _
    // Predicated region
    $region10: #{interaction_mode_net_forward.1} parent=1 // pred_check
      _
    $region11: #{interaction_mode_net_forward.1} parent=1 // pred_check_branch
      %30 = sbr.rel (0) target = $region13
    $region12: #{interaction_mode_net_forward.1} parent=1 // pred_region
      _
    $region13: #{interaction_mode_net_forward.1} parent=1 // pred_fallthru
      _
    // Predicated region
    $region14: #{interaction_mode_net_forward.1} parent=1 // pred_check
      _
    $region15: #{interaction_mode_net_forward.1} parent=1 // pred_check_branch
      %32 = sbr.rel (0) target = $region17
    $region16: #{interaction_mode_net_forward.1} parent=1 // pred_region
      _
    $region17: #{interaction_mode_net_forward.1} parent=1 // pred_fallthru
      _
    // Predicated region
    $region18: #{interaction_mode_net_forward.1} parent=1 // pred_check
      _
    $region19: #{interaction_mode_net_forward.1} parent=1 // pred_check_branch
      %34 = sbr.rel (0) target = $region21
    $region20: #{interaction_mode_net_forward.1} parent=1 // pred_region
      _
    $region21: #{interaction_mode_net_forward.1} parent=1 // pred_fallthru
      _
    // Predicated region
    $region22: #{interaction_mode_net_forward.1} parent=1 // pred_check
      _
    $region23: #{interaction_mode_net_forward.1} parent=1 // pred_check_branch
      %36 = sbr.rel (0) target = $region25
    $region24: #{interaction_mode_net_forward.1} parent=1 // pred_region
      _
    $region25: #{interaction_mode_net_forward.1} parent=1 // pred_fallthru
      _
    // Predicated region
    $region26: #{interaction_mode_net_forward.1} parent=1 // pred_check
      _
    $region27: #{interaction_mode_net_forward.1} parent=1 // pred_check_branch
      %38 = sbr.rel (0) target = $region29
    $region28: #{interaction_mode_net_forward.1} parent=1 // pred_region
      _
    $region29: #{interaction_mode_net_forward.1} parent=1 // pred_fallthru
      _
    // Predicated region
    $region30: #{interaction_mode_net_forward.1} parent=1 // pred_check
      _
    $region31: #{interaction_mode_net_forward.1} parent=1 // pred_check_branch
      %40 = sbr.rel (0) target = $region33
    $region32: #{interaction_mode_net_forward.1} parent=1 // pred_region
      %42 = dma.done [#allocation3], 32768
    $region33: #{interaction_mode_net_forward.1} parent=1 // pred_fallthru
      _
    %v43 = vld [vmem:[%s0] sm:$0xf]
    %v44 = vld [vmem:[#allocation2] sm:$0xff]
    %v45 = vld [vmem:[#allocation2 + $0x8] sm:$0xff]
    %v46 = vld [vmem:[#allocation2 + $0x10] sm:$0xff]
    %v47 = vld [vmem:[#allocation2 + $0x18] sm:$0xff]
    %v48 = vld [vmem:[#allocation2 + $0x20] sm:$0xff]
    %v49 = vld [vmem:[#allocation2 + $0x28] sm:$0xff]
    %v50 = vld [vmem:[#allocation2 + $0x30] sm:$0xff]
    %v51 = vld [vmem:[#allocation2 + $0x38] sm:$0xff]
    %v52 = vld [vmem:[#allocation2 + $0x40] sm:$0xff]
    %v53 = vld [vmem:[#allocation2 + $0x48] sm:$0xff]
    %v54 = vld [vmem:[#allocation2 + $0x50] sm:$0xff]
    %v55 = vld [vmem:[#allocation2 + $0x58] sm:$0xff]
    %v56 = vld [vmem:[#allocation2 + $0x60] sm:$0xff]
    %v57 = vld [vmem:[#allocation2 + $0x68] sm:$0xff]
    %v58 = vld [vmem:[#allocation2 + $0x70] sm:$0xff]
    %v59 = vld [vmem:[#allocation2 + $0x78] sm:$0xff]
    %v60 = vld [vmem:[#allocation2 + $0x80] sm:$0xff]
    %v61 = vld [vmem:[#allocation2 + $0x88] sm:$0xff]
    %v62 = vld [vmem:[#allocation2 + $0x90] sm:$0xff]
    %v63 = vld [vmem:[#allocation2 + $0x98] sm:$0xff]
    %v64 = vld [vmem:[#allocation2 + $0xa0] sm:$0xff]
    %v65 = vld [vmem:[#allocation2 + $0xa8] sm:$0xff]
    %v66 = vld [vmem:[#allocation2 + $0xb0] sm:$0xff]
    %v67 = vld [vmem:[#allocation2 + $0xb8] sm:$0xff]
    %v68 = vld [vmem:[#allocation2 + $0xc0] sm:$0xff]
    %v69 = vld [vmem:[#allocation2 + $0xc8] sm:$0xff]
    %v70 = vld [vmem:[#allocation2 + $0xd0] sm:$0xff]
    %v71 = vld [vmem:[#allocation2 + $0xd8] sm:$0xff]
    %v72 = vld [vmem:[#allocation2 + $0xe0] sm:$0xff]
    %v73 = vld [vmem:[#allocation2 + $0xe8] sm:$0xff]
    %v74 = vld [vmem:[#allocation2 + $0xf0] sm:$0xff]
    %v75 = vld [vmem:[#allocation2 + $0xf8] sm:$0xff]
    %v76 = vld [vmem:[#allocation2 + $0x100] sm:$0xff]
    %v77 = vld [vmem:[#allocation2 + $0x108] sm:$0xff]
    %v78 = vld [vmem:[#allocation2 + $0x110] sm:$0xff]
    %v79 = vld [vmem:[#allocation2 + $0x118] sm:$0xff]
    %v80 = vld [vmem:[#allocation2 + $0x120] sm:$0xff]
    %v81 = vld [vmem:[#allocation2 + $0x128] sm:$0xff]
    %v82 = vld [vmem:[#allocation2 + $0x130] sm:$0xff]
    %v83 = vld [vmem:[#allocation2 + $0x138] sm:$0xff]
    %v84 = vld [vmem:[#allocation2 + $0x140] sm:$0xff]
    %v85 = vld [vmem:[#allocation2 + $0x148] sm:$0xff]
    %v86 = vld [vmem:[#allocation2 + $0x150] sm:$0xff]
    %v87 = vld [vmem:[#allocation2 + $0x158] sm:$0xff]
    %v88 = vld [vmem:[#allocation2 + $0x160] sm:$0xff]
    %v89 = vld [vmem:[#allocation2 + $0x168] sm:$0xff]
    %v90 = vld [vmem:[#allocation2 + $0x170] sm:$0xff]
    %v91 = vld [vmem:[#allocation2 + $0x178] sm:$0xff]
    %v92 = vld [vmem:[#allocation2 + $0x180] sm:$0xff]
    %v93 = vld [vmem:[#allocation2 + $0x188] sm:$0xff]
    %v94 = vld [vmem:[#allocation2 + $0x190] sm:$0xff]
    %v95 = vld [vmem:[#allocation2 + $0x198] sm:$0xff]
    %v96 = vld [vmem:[#allocation2 + $0x1a0] sm:$0xff]
    %v97 = vld [vmem:[#allocation2 + $0x1a8] sm:$0xff]
    %v98 = vld [vmem:[#allocation2 + $0x1b0] sm:$0xff]
    %v99 = vld [vmem:[#allocation2 + $0x1b8] sm:$0xff]
    %v100 = vld [vmem:[#allocation2 + $0x1c0] sm:$0xff]
    %v101 = vld [vmem:[#allocation2 + $0x1c8] sm:$0xff]
    %v102 = vld [vmem:[#allocation2 + $0x1d0] sm:$0xff]
    %v103 = vld [vmem:[#allocation2 + $0x1d8] sm:$0xff]
    %v104 = vld [vmem:[#allocation2 + $0x1e0] sm:$0xff]
    %v105 = vld [vmem:[#allocation2 + $0x1e8] sm:$0xff]
    %v106 = vld [vmem:[#allocation2 + $0x1f0] sm:$0xff]
    %v107 = vld [vmem:[#allocation2 + $0x1f8] sm:$0xff]
    %v108 = vld [vmem:[#allocation2 + $0x200] sm:$0xff]
    %v109 = vld [vmem:[#allocation2 + $0x208] sm:$0xff]
    %v110 = vld [vmem:[#allocation2 + $0x210] sm:$0xff]
    %v111 = vld [vmem:[#allocation2 + $0x218] sm:$0xff]
    %v112 = vld [vmem:[#allocation2 + $0x220] sm:$0xff]
    %v113 = vld [vmem:[#allocation2 + $0x228] sm:$0xff]
    %v114 = vld [vmem:[#allocation2 + $0x230] sm:$0xff]
    %v115 = vld [vmem:[#allocation2 + $0x238] sm:$0xff]
    %v116 = vld [vmem:[#allocation2 + $0x240] sm:$0xff]
    %v117 = vld [vmem:[#allocation2 + $0x248] sm:$0xff]
    %v118 = vld [vmem:[#allocation2 + $0x250] sm:$0xff]
    %v119 = vld [vmem:[#allocation2 + $0x258] sm:$0xff]
    %v120 = vld [vmem:[#allocation2 + $0x260] sm:$0xff]
    %v121 = vld [vmem:[#allocation2 + $0x268] sm:$0xff]
    %v122 = vld [vmem:[#allocation2 + $0x270] sm:$0xff]
    %v123 = vld [vmem:[#allocation2 + $0x278] sm:$0xff]
    %v124 = vld [vmem:[#allocation2 + $0x280] sm:$0xff]
    %v125 = vld [vmem:[#allocation2 + $0x288] sm:$0xff]
    %v126 = vld [vmem:[#allocation2 + $0x290] sm:$0xff]
    %v127 = vld [vmem:[#allocation2 + $0x298] sm:$0xff]
    %v128 = vld [vmem:[#allocation2 + $0x2a0] sm:$0xff]
    %v129 = vld [vmem:[#allocation2 + $0x2a8] sm:$0xff]
    %v130 = vld [vmem:[#allocation2 + $0x2b0] sm:$0xff]
    %v131 = vld [vmem:[#allocation2 + $0x2b8] sm:$0xff]
    %v132 = vld [vmem:[#allocation2 + $0x2c0] sm:$0xff]
    %v133 = vld [vmem:[#allocation2 + $0x2c8] sm:$0xff]
    %v134 = vld [vmem:[#allocation2 + $0x2d0] sm:$0xff]
    %v135 = vld [vmem:[#allocation2 + $0x2d8] sm:$0xff]
    %v136 = vld [vmem:[#allocation2 + $0x2e0] sm:$0xff]
    %v137 = vld [vmem:[#allocation2 + $0x2e8] sm:$0xff]
    %v138 = vld [vmem:[#allocation2 + $0x2f0] sm:$0xff]
    %v139 = vld [vmem:[#allocation2 + $0x2f8] sm:$0xff]
    %v140 = vld [vmem:[#allocation2 + $0x300] sm:$0xff]
    %v141 = vld [vmem:[#allocation2 + $0x308] sm:$0xff]
    %v142 = vld [vmem:[#allocation2 + $0x310] sm:$0xff]
    %v143 = vld [vmem:[#allocation2 + $0x318] sm:$0xff]
    %v144 = vld [vmem:[#allocation2 + $0x320] sm:$0xff]
    %v145 = vld [vmem:[#allocation2 + $0x328] sm:$0xff]
    %v146 = vld [vmem:[#allocation2 + $0x330] sm:$0xff]
    %v147 = vld [vmem:[#allocation2 + $0x338] sm:$0xff]
    %v148 = vld [vmem:[#allocation2 + $0x340] sm:$0xff]
    %v149 = vld [vmem:[#allocation2 + $0x348] sm:$0xff]
    %v150 = vld [vmem:[#allocation2 + $0x350] sm:$0xff]
    %v151 = vld [vmem:[#allocation2 + $0x358] sm:$0xff]
    %v152 = vld [vmem:[#allocation2 + $0x360] sm:$0xff]
    %v153 = vld [vmem:[#allocation2 + $0x368] sm:$0xff]
    %v154 = vld [vmem:[#allocation2 + $0x370] sm:$0xff]
    %v155 = vld [vmem:[#allocation2 + $0x378] sm:$0xff]
    %v156 = vld [vmem:[#allocation2 + $0x380] sm:$0xff]
    %v157 = vld [vmem:[#allocation2 + $0x388] sm:$0xff]
    %v158 = vld [vmem:[#allocation2 + $0x390] sm:$0xff]
    %v159 = vld [vmem:[#allocation2 + $0x398] sm:$0xff]
    %v160 = vld [vmem:[#allocation2 + $0x3a0] sm:$0xff]
    %v161 = vld [vmem:[#allocation2 + $0x3a8] sm:$0xff]
    %v162 = vld [vmem:[#allocation2 + $0x3b0] sm:$0xff]
    %v163 = vld [vmem:[#allocation2 + $0x3b8] sm:$0xff]
    %v164 = vld [vmem:[#allocation2 + $0x3c0] sm:$0xff]
    %v165 = vld [vmem:[#allocation2 + $0x3c8] sm:$0xff]
    %v166 = vld [vmem:[#allocation2 + $0x3d0] sm:$0xff]
    %v167 = vld [vmem:[#allocation2 + $0x3d8] sm:$0xff]
    %v168 = vld [vmem:[#allocation2 + $0x3e0] sm:$0xff]
    %v169 = vld [vmem:[#allocation2 + $0x3e8] sm:$0xff]
    %v170 = vld [vmem:[#allocation2 + $0x3f0] sm:$0xff]
    %v171 = vld [vmem:[#allocation2 + $0x3f8] sm:$0xff]
    %v172 = vld [vmem:[#allocation2 + $0x400] sm:$0xff]
    %v173 = vld [vmem:[#allocation2 + $0x408] sm:$0xff]
    %v174 = vld [vmem:[#allocation2 + $0x410] sm:$0xff]
    %v175 = vld [vmem:[#allocation2 + $0x418] sm:$0xff]
    %v176 = vld [vmem:[#allocation2 + $0x420] sm:$0xff]
    %v177 = vld [vmem:[#allocation2 + $0x428] sm:$0xff]
    %v178 = vld [vmem:[#allocation2 + $0x430] sm:$0xff]
    %v179 = vld [vmem:[#allocation2 + $0x438] sm:$0xff]
    %v180 = vld [vmem:[#allocation2 + $0x440] sm:$0xff]
    %v181 = vld [vmem:[#allocation2 + $0x448] sm:$0xff]
    %v182 = vld [vmem:[#allocation2 + $0x450] sm:$0xff]
    %v183 = vld [vmem:[#allocation2 + $0x458] sm:$0xff]
    %v184 = vld [vmem:[#allocation2 + $0x460] sm:$0xff]
    %v185 = vld [vmem:[#allocation2 + $0x468] sm:$0xff]
    %v186 = vld [vmem:[#allocation2 + $0x470] sm:$0xff]
    %v187 = vld [vmem:[#allocation2 + $0x478] sm:$0xff]
    %v188 = vld [vmem:[#allocation2 + $0x480] sm:$0xff]
    %v189 = vld [vmem:[#allocation2 + $0x488] sm:$0xff]
    %v190 = vld [vmem:[#allocation2 + $0x490] sm:$0xff]
    %v191 = vld [vmem:[#allocation2 + $0x498] sm:$0xff]
    %v192 = vld [vmem:[#allocation2 + $0x4a0] sm:$0xff]
    %v193 = vld [vmem:[#allocation2 + $0x4a8] sm:$0xff]
    %v194 = vld [vmem:[#allocation2 + $0x4b0] sm:$0xff]
    %v195 = vld [vmem:[#allocation2 + $0x4b8] sm:$0xff]
    %v196 = vld [vmem:[#allocation2 + $0x4c0] sm:$0xff]
    %v197 = vld [vmem:[#allocation2 + $0x4c8] sm:$0xff]
    %v198 = vld [vmem:[#allocation2 + $0x4d0] sm:$0xff]
    %v199 = vld [vmem:[#allocation2 + $0x4d8] sm:$0xff]
    %v200 = vld [vmem:[#allocation2 + $0x4e0] sm:$0xff]
    %v201 = vld [vmem:[#allocation2 + $0x4e8] sm:$0xff]
    %v202 = vld [vmem:[#allocation2 + $0x4f0] sm:$0xff]
    %v203 = vld [vmem:[#allocation2 + $0x4f8] sm:$0xff]
    %v204 = vld [vmem:[#allocation2 + $0x500] sm:$0xff]
    %v205 = vld [vmem:[#allocation2 + $0x508] sm:$0xff]
    %v206 = vld [vmem:[#allocation2 + $0x510] sm:$0xff]
    %v207 = vld [vmem:[#allocation2 + $0x518] sm:$0xff]
    %v208 = vld [vmem:[#allocation2 + $0x520] sm:$0xff]
    %v209 = vld [vmem:[#allocation2 + $0x528] sm:$0xff]
    %v210 = vld [vmem:[#allocation2 + $0x530] sm:$0xff]
    %v211 = vld [vmem:[#allocation2 + $0x538] sm:$0xff]
    %v212 = vld [vmem:[#allocation2 + $0x540] sm:$0xff]
    %v213 = vld [vmem:[#allocation2 + $0x548] sm:$0xff]
    %v214 = vld [vmem:[#allocation2 + $0x550] sm:$0xff]
    %v215 = vld [vmem:[#allocation2 + $0x558] sm:$0xff]
    %v216 = vld [vmem:[#allocation2 + $0x560] sm:$0xff]
    %v217 = vld [vmem:[#allocation2 + $0x568] sm:$0xff]
    %v218 = vld [vmem:[#allocation2 + $0x570] sm:$0xff]
    %v219 = vld [vmem:[#allocation2 + $0x578] sm:$0xff]
    %v220 = vld [vmem:[#allocation2 + $0x580] sm:$0xff]
    %v221 = vld [vmem:[#allocation2 + $0x588] sm:$0xff]
    %v222 = vld [vmem:[#allocation2 + $0x590] sm:$0xff]
    %v223 = vld [vmem:[#allocation2 + $0x598] sm:$0xff]
    %v224 = vld [vmem:[#allocation2 + $0x5a0] sm:$0xff]
    %v225 = vld [vmem:[#allocation2 + $0x5a8] sm:$0xff]
    %v226 = vld [vmem:[#allocation2 + $0x5b0] sm:$0xff]
    %v227 = vld [vmem:[#allocation2 + $0x5b8] sm:$0xff]
    %v228 = vld [vmem:[#allocation2 + $0x5c0] sm:$0xff]
    %v229 = vld [vmem:[#allocation2 + $0x5c8] sm:$0xff]
    %v230 = vld [vmem:[#allocation2 + $0x5d0] sm:$0xff]
    %v231 = vld [vmem:[#allocation2 + $0x5d8] sm:$0xff]
    %v232 = vld [vmem:[#allocation2 + $0x5e0] sm:$0xff]
    %v233 = vld [vmem:[#allocation2 + $0x5e8] sm:$0xff]
    %v234 = vld [vmem:[#allocation2 + $0x5f0] sm:$0xff]
    %v235 = vld [vmem:[#allocation2 + $0x5f8] sm:$0xff]
    %v236 = vld [vmem:[#allocation2 + $0x600] sm:$0xff]
    %v237 = vld [vmem:[#allocation2 + $0x608] sm:$0xff]
    %v238 = vld [vmem:[#allocation2 + $0x610] sm:$0xff]
    %v239 = vld [vmem:[#allocation2 + $0x618] sm:$0xff]
    %v240 = vld [vmem:[#allocation2 + $0x620] sm:$0xff]
    %v241 = vld [vmem:[#allocation2 + $0x628] sm:$0xff]
    %v242 = vld [vmem:[#allocation2 + $0x630] sm:$0xff]
    %v243 = vld [vmem:[#allocation2 + $0x638] sm:$0xff]
    %v244 = vld [vmem:[#allocation2 + $0x640] sm:$0xff]
    %v245 = vld [vmem:[#allocation2 + $0x648] sm:$0xff]
    %v246 = vld [vmem:[#allocation2 + $0x650] sm:$0xff]
    %v247 = vld [vmem:[#allocation2 + $0x658] sm:$0xff]
    %v248 = vld [vmem:[#allocation2 + $0x660] sm:$0xff]
    %v249 = vld [vmem:[#allocation2 + $0x668] sm:$0xff]
    %v250 = vld [vmem:[#allocation2 + $0x670] sm:$0xff]
    %v251 = vld [vmem:[#allocation2 + $0x678] sm:$0xff]
    %v252 = vld [vmem:[#allocation2 + $0x680] sm:$0xff]
    %v253 = vld [vmem:[#allocation2 + $0x688] sm:$0xff]
    %v254 = vld [vmem:[#allocation2 + $0x690] sm:$0xff]
    %v255 = vld [vmem:[#allocation2 + $0x698] sm:$0xff]
    %v256 = vld [vmem:[#allocation2 + $0x6a0] sm:$0xff]
    %v257 = vld [vmem:[#allocation2 + $0x6a8] sm:$0xff]
    %v258 = vld [vmem:[#allocation2 + $0x6b0] sm:$0xff]
    %v259 = vld [vmem:[#allocation2 + $0x6b8] sm:$0xff]
    %v260 = vld [vmem:[#allocation2 + $0x6c0] sm:$0xff]
    %v261 = vld [vmem:[#allocation2 + $0x6c8] sm:$0xff]
    %v262 = vld [vmem:[#allocation2 + $0x6d0] sm:$0xff]
    %v263 = vld [vmem:[#allocation2 + $0x6d8] sm:$0xff]
    %v264 = vld [vmem:[#allocation2 + $0x6e0] sm:$0xff]
    %v265 = vld [vmem:[#allocation2 + $0x6e8] sm:$0xff]
    %v266 = vld [vmem:[#allocation2 + $0x6f0] sm:$0xff]
    %v267 = vld [vmem:[#allocation2 + $0x6f8] sm:$0xff]
    %v268 = vld [vmem:[#allocation2 + $0x700] sm:$0xff]
    %v269 = vld [vmem:[#allocation2 + $0x708] sm:$0xff]
    %v270 = vld [vmem:[#allocation2 + $0x710] sm:$0xff]
    %v271 = vld [vmem:[#allocation2 + $0x718] sm:$0xff]
    %v272 = vld [vmem:[#allocation2 + $0x720] sm:$0xff]
    %v273 = vld [vmem:[#allocation2 + $0x728] sm:$0xff]
    %v274 = vld [vmem:[#allocation2 + $0x730] sm:$0xff]
    %v275 = vld [vmem:[#allocation2 + $0x738] sm:$0xff]
    %v276 = vld [vmem:[#allocation2 + $0x740] sm:$0xff]
    %v277 = vld [vmem:[#allocation2 + $0x748] sm:$0xff]
    %v278 = vld [vmem:[#allocation2 + $0x750] sm:$0xff]
    %v279 = vld [vmem:[#allocation2 + $0x758] sm:$0xff]
    %v280 = vld [vmem:[#allocation2 + $0x760] sm:$0xff]
    %v281 = vld [vmem:[#allocation2 + $0x768] sm:$0xff]
    %v282 = vld [vmem:[#allocation2 + $0x770] sm:$0xff]
    %v283 = vld [vmem:[#allocation2 + $0x778] sm:$0xff]
    %v284 = vld [vmem:[#allocation2 + $0x780] sm:$0xff]
    %v285 = vld [vmem:[#allocation2 + $0x788] sm:$0xff]
    %v286 = vld [vmem:[#allocation2 + $0x790] sm:$0xff]
    %v287 = vld [vmem:[#allocation2 + $0x798] sm:$0xff]
    %v288 = vld [vmem:[#allocation2 + $0x7a0] sm:$0xff]
    %v289 = vld [vmem:[#allocation2 + $0x7a8] sm:$0xff]
    %v290 = vld [vmem:[#allocation2 + $0x7b0] sm:$0xff]
    %v291 = vld [vmem:[#allocation2 + $0x7b8] sm:$0xff]
    %v292 = vld [vmem:[#allocation2 + $0x7c0] sm:$0xff]
    %v293 = vld [vmem:[#allocation2 + $0x7c8] sm:$0xff]
    %v294 = vld [vmem:[#allocation2 + $0x7d0] sm:$0xff]
    %v295 = vld [vmem:[#allocation2 + $0x7d8] sm:$0xff]
    %v296 = vld [vmem:[#allocation2 + $0x7e0] sm:$0xff]
    %v297 = vld [vmem:[#allocation2 + $0x7e8] sm:$0xff]
    %v298 = vld [vmem:[#allocation2 + $0x7f0] sm:$0xff]
    %v299 = vld [vmem:[#allocation2 + $0x7f8] sm:$0xff]
    %301 = vst [vmem:[#allocation1] ss:$4 sm:$0xff] %v43
    %v302 = vld.sshfl [vmem:[#allocation1] sm:$0xff pattern:$0x73625140]
    %v303 = vld.sshfl [vmem:[#allocation1 + $0x8] sm:$0xff pattern:$0x73625140]
    %306 = vmatpush.msra.mxu0 %v164
    %307 = vmatpush.msra.mxu0 %v156
    %308 = vmatpush.msra.mxu0 %v148
    %309 = vmatpush.msra.mxu0 %v140
    %310 = vmatpush.msra.mxu0 %v132
    %311 = vmatpush.msra.mxu0 %v124
    %312 = vmatpush.msra.mxu0 %v116
    %313 = vmatpush.msra.mxu0 %v108
    %314 = vmatpush.msra.mxu0 %v100
    %315 = vmatpush.msra.mxu0 %v92
    %316 = vmatpush.msra.mxu0 %v84
    %317 = vmatpush.msra.mxu0 %v76
    %318 = vmatpush.msra.mxu0 %v68
    %319 = vmatpush.msra.mxu0 %v60
    %320 = vmatpush.msra.mxu0 %v52
    %321 = vmatpush.msra.mxu0 %v44
    %322 = vmatmul.f32.gmra.mxu0 %v302
    %v323 = vpop.f32.mrf.mxu0
    %v324 = vadd.f32 0.0, %v323
    %325 = vdwg.mxu0
    %326 = vmatpush.msra.mxu0 %v292
    %327 = vmatpush.msra.mxu0 %v284
    %328 = vmatpush.msra.mxu0 %v276
    %329 = vmatpush.msra.mxu0 %v268
    %330 = vmatpush.msra.mxu0 %v260
    %331 = vmatpush.msra.mxu0 %v252
    %332 = vmatpush.msra.mxu0 %v244
    %333 = vmatpush.msra.mxu0 %v236
    %334 = vmatpush.msra.mxu0 %v228
    %335 = vmatpush.msra.mxu0 %v220
    %336 = vmatpush.msra.mxu0 %v212
    %337 = vmatpush.msra.mxu0 %v204
    %338 = vmatpush.msra.mxu0 %v196
    %339 = vmatpush.msra.mxu0 %v188
    %340 = vmatpush.msra.mxu0 %v180
    %341 = vmatpush.msra.mxu0 %v172
    %342 = vmatmul.f32.gmra.mxu0 %v303
    %v343 = vpop.f32.mrf.mxu0
    %v344 = vadd.f32 %v324, %v343
    %345 = vdwg.mxu0
    %346 = vmatpush.msra.mxu0 %v165
    %347 = vmatpush.msra.mxu0 %v157
    %348 = vmatpush.msra.mxu0 %v149
    %349 = vmatpush.msra.mxu0 %v141
    %350 = vmatpush.msra.mxu0 %v133
    %351 = vmatpush.msra.mxu0 %v125
    %352 = vmatpush.msra.mxu0 %v117
    %353 = vmatpush.msra.mxu0 %v109
    %354 = vmatpush.msra.mxu0 %v101
    %355 = vmatpush.msra.mxu0 %v93
    %356 = vmatpush.msra.mxu0 %v85
    %357 = vmatpush.msra.mxu0 %v77
    %358 = vmatpush.msra.mxu0 %v69
    %359 = vmatpush.msra.mxu0 %v61
    %360 = vmatpush.msra.mxu0 %v53
    %361 = vmatpush.msra.mxu0 %v45
    %362 = vmatmul.f32.gmra.mxu0 %v302
    %v363 = vpop.f32.mrf.mxu0
    %v364 = vadd.f32 0.0, %v363
    %365 = vdwg.mxu0
    %366 = vmatpush.msra.mxu0 %v293
    %367 = vmatpush.msra.mxu0 %v285
    %368 = vmatpush.msra.mxu0 %v277
    %369 = vmatpush.msra.mxu0 %v269
    %370 = vmatpush.msra.mxu0 %v261
    %371 = vmatpush.msra.mxu0 %v253
    %372 = vmatpush.msra.mxu0 %v245
    %373 = vmatpush.msra.mxu0 %v237
    %374 = vmatpush.msra.mxu0 %v229
    %375 = vmatpush.msra.mxu0 %v221
    %376 = vmatpush.msra.mxu0 %v213
    %377 = vmatpush.msra.mxu0 %v205
    %378 = vmatpush.msra.mxu0 %v197
    %379 = vmatpush.msra.mxu0 %v189
    %380 = vmatpush.msra.mxu0 %v181
    %381 = vmatpush.msra.mxu0 %v173
    %382 = vmatmul.f32.gmra.mxu0 %v303
    %v383 = vpop.f32.mrf.mxu0
    %v384 = vadd.f32 %v364, %v383
    %385 = vdwg.mxu0
    %386 = vmatpush.msra.mxu0 %v166
    %387 = vmatpush.msra.mxu0 %v158
    %388 = vmatpush.msra.mxu0 %v150
    %389 = vmatpush.msra.mxu0 %v142
    %390 = vmatpush.msra.mxu0 %v134
    %391 = vmatpush.msra.mxu0 %v126
    %392 = vmatpush.msra.mxu0 %v118
    %393 = vmatpush.msra.mxu0 %v110
    %394 = vmatpush.msra.mxu0 %v102
    %395 = vmatpush.msra.mxu0 %v94
    %396 = vmatpush.msra.mxu0 %v86
    %397 = vmatpush.msra.mxu0 %v78
    %398 = vmatpush.msra.mxu0 %v70
    %399 = vmatpush.msra.mxu0 %v62
    %400 = vmatpush.msra.mxu0 %v54
    %401 = vmatpush.msra.mxu0 %v46
    %402 = vmatmul.f32.gmra.mxu0 %v302
    %v403 = vpop.f32.mrf.mxu0
    %v404 = vadd.f32 0.0, %v403
    %405 = vdwg.mxu0
    %406 = vmatpush.msra.mxu0 %v294
    %407 = vmatpush.msra.mxu0 %v286
    %408 = vmatpush.msra.mxu0 %v278
    %409 = vmatpush.msra.mxu0 %v270
    %410 = vmatpush.msra.mxu0 %v262
    %411 = vmatpush.msra.mxu0 %v254
    %412 = vmatpush.msra.mxu0 %v246
    %413 = vmatpush.msra.mxu0 %v238
    %414 = vmatpush.msra.mxu0 %v230
    %415 = vmatpush.msra.mxu0 %v222
    %416 = vmatpush.msra.mxu0 %v214
    %417 = vmatpush.msra.mxu0 %v206
    %418 = vmatpush.msra.mxu0 %v198
    %419 = vmatpush.msra.mxu0 %v190
    %420 = vmatpush.msra.mxu0 %v182
    %421 = vmatpush.msra.mxu0 %v174
    %422 = vmatmul.f32.gmra.mxu0 %v303
    %v423 = vpop.f32.mrf.mxu0
    %v424 = vadd.f32 %v404, %v423
    %425 = vdwg.mxu0
    %426 = vmatpush.msra.mxu0 %v167
    %427 = vmatpush.msra.mxu0 %v159
    %428 = vmatpush.msra.mxu0 %v151
    %429 = vmatpush.msra.mxu0 %v143
    %430 = vmatpush.msra.mxu0 %v135
    %431 = vmatpush.msra.mxu0 %v127
    %432 = vmatpush.msra.mxu0 %v119
    %433 = vmatpush.msra.mxu0 %v111
    %434 = vmatpush.msra.mxu0 %v103
    %435 = vmatpush.msra.mxu0 %v95
    %436 = vmatpush.msra.mxu0 %v87
    %437 = vmatpush.msra.mxu0 %v79
    %438 = vmatpush.msra.mxu0 %v71
    %439 = vmatpush.msra.mxu0 %v63
    %440 = vmatpush.msra.mxu0 %v55
    %441 = vmatpush.msra.mxu0 %v47
    %442 = vmatmul.f32.gmra.mxu0 %v302
    %v443 = vpop.f32.mrf.mxu0
    %v444 = vadd.f32 0.0, %v443
    %445 = vdwg.mxu0
    %446 = vmatpush.msra.mxu0 %v295
    %447 = vmatpush.msra.mxu0 %v287
    %448 = vmatpush.msra.mxu0 %v279
    %449 = vmatpush.msra.mxu0 %v271
    %450 = vmatpush.msra.mxu0 %v263
    %451 = vmatpush.msra.mxu0 %v255
    %452 = vmatpush.msra.mxu0 %v247
    %453 = vmatpush.msra.mxu0 %v239
    %454 = vmatpush.msra.mxu0 %v231
    %455 = vmatpush.msra.mxu0 %v223
    %456 = vmatpush.msra.mxu0 %v215
    %457 = vmatpush.msra.mxu0 %v207
    %458 = vmatpush.msra.mxu0 %v199
    %459 = vmatpush.msra.mxu0 %v191
    %460 = vmatpush.msra.mxu0 %v183
    %461 = vmatpush.msra.mxu0 %v175
    %462 = vmatmul.f32.gmra.mxu0 %v303
    %v463 = vpop.f32.mrf.mxu0
    %v464 = vadd.f32 %v444, %v463
    %465 = vdwg.mxu0
    %466 = vmatpush.msra.mxu0 %v168
    %467 = vmatpush.msra.mxu0 %v160
    %468 = vmatpush.msra.mxu0 %v152
    %469 = vmatpush.msra.mxu0 %v144
    %470 = vmatpush.msra.mxu0 %v136
    %471 = vmatpush.msra.mxu0 %v128
    %472 = vmatpush.msra.mxu0 %v120
    %473 = vmatpush.msra.mxu0 %v112
    %474 = vmatpush.msra.mxu0 %v104
    %475 = vmatpush.msra.mxu0 %v96
    %476 = vmatpush.msra.mxu0 %v88
    %477 = vmatpush.msra.mxu0 %v80
    %478 = vmatpush.msra.mxu0 %v72
    %479 = vmatpush.msra.mxu0 %v64
    %480 = vmatpush.msra.mxu0 %v56
    %481 = vmatpush.msra.mxu0 %v48
    %482 = vmatmul.f32.gmra.mxu0 %v302
    %v483 = vpop.f32.mrf.mxu0
    %v484 = vadd.f32 0.0, %v483
    %485 = vdwg.mxu0
    %486 = vmatpush.msra.mxu0 %v296
    %487 = vmatpush.msra.mxu0 %v288
    %488 = vmatpush.msra.mxu0 %v280
    %489 = vmatpush.msra.mxu0 %v272
    %490 = vmatpush.msra.mxu0 %v264
    %491 = vmatpush.msra.mxu0 %v256
    %492 = vmatpush.msra.mxu0 %v248
    %493 = vmatpush.msra.mxu0 %v240
    %494 = vmatpush.msra.mxu0 %v232
    %495 = vmatpush.msra.mxu0 %v224
    %496 = vmatpush.msra.mxu0 %v216
    %497 = vmatpush.msra.mxu0 %v208
    %498 = vmatpush.msra.mxu0 %v200
    %499 = vmatpush.msra.mxu0 %v192
    %500 = vmatpush.msra.mxu0 %v184
    %501 = vmatpush.msra.mxu0 %v176
    %502 = vmatmul.f32.gmra.mxu0 %v303
    %v503 = vpop.f32.mrf.mxu0
    %v504 = vadd.f32 %v484, %v503
    %505 = vdwg.mxu0
    %506 = vmatpush.msra.mxu0 %v169
    %507 = vmatpush.msra.mxu0 %v161
    %508 = vmatpush.msra.mxu0 %v153
    %509 = vmatpush.msra.mxu0 %v145
    %510 = vmatpush.msra.mxu0 %v137
    %511 = vmatpush.msra.mxu0 %v129
    %512 = vmatpush.msra.mxu0 %v121
    %513 = vmatpush.msra.mxu0 %v113
    %514 = vmatpush.msra.mxu0 %v105
    %515 = vmatpush.msra.mxu0 %v97
    %516 = vmatpush.msra.mxu0 %v89
    %517 = vmatpush.msra.mxu0 %v81
    %518 = vmatpush.msra.mxu0 %v73
    %519 = vmatpush.msra.mxu0 %v65
    %520 = vmatpush.msra.mxu0 %v57
    %521 = vmatpush.msra.mxu0 %v49
    %522 = vmatmul.f32.gmra.mxu0 %v302
    %v523 = vpop.f32.mrf.mxu0
    %v524 = vadd.f32 0.0, %v523
    %525 = vdwg.mxu0
    %526 = vmatpush.msra.mxu0 %v297
    %527 = vmatpush.msra.mxu0 %v289
    %528 = vmatpush.msra.mxu0 %v281
    %529 = vmatpush.msra.mxu0 %v273
    %530 = vmatpush.msra.mxu0 %v265
    %531 = vmatpush.msra.mxu0 %v257
    %532 = vmatpush.msra.mxu0 %v249
    %533 = vmatpush.msra.mxu0 %v241
    %534 = vmatpush.msra.mxu0 %v233
    %535 = vmatpush.msra.mxu0 %v225
    %536 = vmatpush.msra.mxu0 %v217
    %537 = vmatpush.msra.mxu0 %v209
    %538 = vmatpush.msra.mxu0 %v201
    %539 = vmatpush.msra.mxu0 %v193
    %540 = vmatpush.msra.mxu0 %v185
    %541 = vmatpush.msra.mxu0 %v177
    %542 = vmatmul.f32.gmra.mxu0 %v303
    %v543 = vpop.f32.mrf.mxu0
    %v544 = vadd.f32 %v524, %v543
    %545 = vdwg.mxu0
    %546 = vmatpush.msra.mxu0 %v170
    %547 = vmatpush.msra.mxu0 %v162
    %548 = vmatpush.msra.mxu0 %v154
    %549 = vmatpush.msra.mxu0 %v146
    %550 = vmatpush.msra.mxu0 %v138
    %551 = vmatpush.msra.mxu0 %v130
    %552 = vmatpush.msra.mxu0 %v122
    %553 = vmatpush.msra.mxu0 %v114
    %554 = vmatpush.msra.mxu0 %v106
    %555 = vmatpush.msra.mxu0 %v98
    %556 = vmatpush.msra.mxu0 %v90
    %557 = vmatpush.msra.mxu0 %v82
    %558 = vmatpush.msra.mxu0 %v74
    %559 = vmatpush.msra.mxu0 %v66
    %560 = vmatpush.msra.mxu0 %v58
    %561 = vmatpush.msra.mxu0 %v50
    %562 = vmatmul.f32.gmra.mxu0 %v302
    %v563 = vpop.f32.mrf.mxu0
    %v564 = vadd.f32 0.0, %v563
    %565 = vdwg.mxu0
    %566 = vmatpush.msra.mxu0 %v298
    %567 = vmatpush.msra.mxu0 %v290
    %568 = vmatpush.msra.mxu0 %v282
    %569 = vmatpush.msra.mxu0 %v274
    %570 = vmatpush.msra.mxu0 %v266
    %571 = vmatpush.msra.mxu0 %v258
    %572 = vmatpush.msra.mxu0 %v250
    %573 = vmatpush.msra.mxu0 %v242
    %574 = vmatpush.msra.mxu0 %v234
    %575 = vmatpush.msra.mxu0 %v226
    %576 = vmatpush.msra.mxu0 %v218
    %577 = vmatpush.msra.mxu0 %v210
    %578 = vmatpush.msra.mxu0 %v202
    %579 = vmatpush.msra.mxu0 %v194
    %580 = vmatpush.msra.mxu0 %v186
    %581 = vmatpush.msra.mxu0 %v178
    %582 = vmatmul.f32.gmra.mxu0 %v303
    %v583 = vpop.f32.mrf.mxu0
    %v584 = vadd.f32 %v564, %v583
    %585 = vdwg.mxu0
    %586 = vmatpush.msra.mxu0 %v171
    %587 = vmatpush.msra.mxu0 %v163
    %588 = vmatpush.msra.mxu0 %v155
    %589 = vmatpush.msra.mxu0 %v147
    %590 = vmatpush.msra.mxu0 %v139
    %591 = vmatpush.msra.mxu0 %v131
    %592 = vmatpush.msra.mxu0 %v123
    %593 = vmatpush.msra.mxu0 %v115
    %594 = vmatpush.msra.mxu0 %v107
    %595 = vmatpush.msra.mxu0 %v99
    %596 = vmatpush.msra.mxu0 %v91
    %597 = vmatpush.msra.mxu0 %v83
    %598 = vmatpush.msra.mxu0 %v75
    %599 = vmatpush.msra.mxu0 %v67
    %600 = vmatpush.msra.mxu0 %v59
    %601 = vmatpush.msra.mxu0 %v51
    %602 = vmatmul.f32.gmra.mxu0 %v302
    %v603 = vpop.f32.mrf.mxu0
    %v604 = vadd.f32 0.0, %v603
    %605 = vdwg.mxu0
    %606 = vmatpush.msra.mxu0 %v299
    %607 = vmatpush.msra.mxu0 %v291
    %608 = vmatpush.msra.mxu0 %v283
    %609 = vmatpush.msra.mxu0 %v275
    %610 = vmatpush.msra.mxu0 %v267
    %611 = vmatpush.msra.mxu0 %v259
    %612 = vmatpush.msra.mxu0 %v251
    %613 = vmatpush.msra.mxu0 %v243
    %614 = vmatpush.msra.mxu0 %v235
    %615 = vmatpush.msra.mxu0 %v227
    %616 = vmatpush.msra.mxu0 %v219
    %617 = vmatpush.msra.mxu0 %v211
    %618 = vmatpush.msra.mxu0 %v203
    %619 = vmatpush.msra.mxu0 %v195
    %620 = vmatpush.msra.mxu0 %v187
    %621 = vmatpush.msra.mxu0 %v179
    %622 = vmatmul.f32.gmra.mxu0 %v303
    %v623 = vpop.f32.mrf.mxu0
    %v624 = vadd.f32 %v604, %v623
    %625 = vdwg.mxu0
    %v626 = vmax.f32 %v344, %v424
    %v627 = vmax.f32 %v384, %v464
    %v628 = vmax.f32 %v504, %v584
    %v629 = vmax.f32 %v544, %v624
    %v630 = vmax.f32 %v626, %v628
    %v631 = vmax.f32 %v627, %v629
    %v632 = vld [vmem:[%s2] sm:$0x3]
    %v634 = vperm.slane %v632, 0
    %v635 = vperm.slane %v632, 1
    %v638 = vadd.f32 %v630, %v634
    %v639 = vadd.f32 %v631, %v635
    %v640 = vmax.f32 %v638, 0.0
    %v641 = vmax.f32 %v639, 0.0
    %v642 = vld [vmem:[%s3] sm:$0xff]
    %v643 = vld [vmem:[%s3 + $0x8] sm:$0xff]
    %v644 = vld [vmem:[%s3 + $0x10] sm:$0xff]
    %v645 = vld [vmem:[%s3 + $0x18] sm:$0xff]
    %v646 = vld [vmem:[%s3 + $0x20] sm:$0xff]
    %v647 = vld [vmem:[%s3 + $0x28] sm:$0xff]
    %v648 = vld [vmem:[%s3 + $0x30] sm:$0xff]
    %v649 = vld [vmem:[%s3 + $0x38] sm:$0xff]
    %v650 = vld [vmem:[%s3 + $0x40] sm:$0xff]
    %v651 = vld [vmem:[%s3 + $0x48] sm:$0xff]
    %v652 = vld [vmem:[%s3 + $0x50] sm:$0xff]
    %v653 = vld [vmem:[%s3 + $0x58] sm:$0xff]
    %v654 = vld [vmem:[%s3 + $0x60] sm:$0xff]
    %v655 = vld [vmem:[%s3 + $0x68] sm:$0xff]
    %v656 = vld [vmem:[%s3 + $0x70] sm:$0xff]
    %v657 = vld [vmem:[%s3 + $0x78] sm:$0xff]
    %v658 = vld [vmem:[%s3 + $0x80] sm:$0xff]
    %v659 = vld [vmem:[%s3 + $0x88] sm:$0xff]
    %v660 = vld [vmem:[%s3 + $0x90] sm:$0xff]
    %v661 = vld [vmem:[%s3 + $0x98] sm:$0xff]
    %v662 = vld [vmem:[%s3 + $0xa0] sm:$0xff]
    %v663 = vld [vmem:[%s3 + $0xa8] sm:$0xff]
    %v664 = vld [vmem:[%s3 + $0xb0] sm:$0xff]
    %v665 = vld [vmem:[%s3 + $0xb8] sm:$0xff]
    %v666 = vld [vmem:[%s3 + $0xc0] sm:$0xff]
    %v667 = vld [vmem:[%s3 + $0xc8] sm:$0xff]
    %v668 = vld [vmem:[%s3 + $0xd0] sm:$0xff]
    %v669 = vld [vmem:[%s3 + $0xd8] sm:$0xff]
    %v670 = vld [vmem:[%s3 + $0xe0] sm:$0xff]
    %v671 = vld [vmem:[%s3 + $0xe8] sm:$0xff]
    %v672 = vld [vmem:[%s3 + $0xf0] sm:$0xff]
    %v673 = vld [vmem:[%s3 + $0xf8] sm:$0xff]
    %v674 = vld [vmem:[%s4] sm:$0x1]
    %v676 = vperm.slane %v674, 0
    %678 = vmatpush.msra.mxu0 %v657
    %679 = vmatpush.msra.mxu0 %v656
    %680 = vmatpush.msra.mxu0 %v655
    %681 = vmatpush.msra.mxu0 %v654
    %682 = vmatpush.msra.mxu0 %v653
    %683 = vmatpush.msra.mxu0 %v652
    %684 = vmatpush.msra.mxu0 %v651
    %685 = vmatpush.msra.mxu0 %v650
    %686 = vmatpush.msra.mxu0 %v649
    %687 = vmatpush.msra.mxu0 %v648
    %688 = vmatpush.msra.mxu0 %v647
    %689 = vmatpush.msra.mxu0 %v646
    %690 = vmatpush.msra.mxu0 %v645
    %691 = vmatpush.msra.mxu0 %v644
    %692 = vmatpush.msra.mxu0 %v643
    %693 = vmatpush.msra.mxu0 %v642
    %694 = vmatmul.f32.gmra.mxu0 %v640
    %v695 = vpop.f32.mrf.mxu0
    %v696 = vadd.f32 %v676, %v695
    %697 = vdwg.mxu0
    %698 = vmatpush.msra.mxu0 %v673
    %699 = vmatpush.msra.mxu0 %v672
    %700 = vmatpush.msra.mxu0 %v671
    %701 = vmatpush.msra.mxu0 %v670
    %702 = vmatpush.msra.mxu0 %v669
    %703 = vmatpush.msra.mxu0 %v668
    %704 = vmatpush.msra.mxu0 %v667
    %705 = vmatpush.msra.mxu0 %v666
    %706 = vmatpush.msra.mxu0 %v665
    %707 = vmatpush.msra.mxu0 %v664
    %708 = vmatpush.msra.mxu0 %v663
    %709 = vmatpush.msra.mxu0 %v662
    %710 = vmatpush.msra.mxu0 %v661
    %711 = vmatpush.msra.mxu0 %v660
    %712 = vmatpush.msra.mxu0 %v659
    %713 = vmatpush.msra.mxu0 %v658
    %714 = vmatmul.f32.gmra.mxu0 %v641
    %v715 = vpop.f32.mrf.mxu0
    %v716 = vadd.f32 %v696, %v715
    %717 = vdwg.mxu0
    %v718 = vmax.f32 %v716, 0.0
    %v719 = vld [vmem:[%s5] sm:$0xff]
    %v720 = vld [vmem:[%s5 + $0x8] sm:$0xff]
    %v721 = vld [vmem:[%s5 + $0x10] sm:$0xff]
    %v722 = vld [vmem:[%s5 + $0x18] sm:$0xff]
    %v723 = vld [vmem:[%s6] sm:$0x1]
    %v725 = vperm.slane %v723, 0
    %vm727 = vcmask 261120
    %v729 = vsel %vm727, %v718, 0
    %731 = vmatpush.msra.mxu0 0.0
    %732 = vmatpush.msra.mxu0 0.0
    %733 = vmatpush.msra.mxu0 0.0
    %734 = vmatpush.msra.mxu0 0.0
    %735 = vmatpush.msra.mxu0 0.0
    %736 = vmatpush.msra.mxu0 0.0
    %737 = vmatpush.msra.mxu0 0.0
    %738 = vmatpush.msra.mxu0 0.0
    %739 = vmatpush.msra.mxu0 0.0
    %740 = vmatpush.msra.mxu0 0.0
    %741 = vmatpush.msra.mxu0 0.0
    %742 = vmatpush.msra.mxu0 0.0
    %743 = vmatpush.msra.mxu0 %v722
    %744 = vmatpush.msra.mxu0 %v721
    %745 = vmatpush.msra.mxu0 %v720
    %746 = vmatpush.msra.mxu0 %v719
    %747 = vmatmul.f32.gmra.mxu0 %v729
    %v748 = vpop.f32.mrf.mxu0
    %v749 = vadd.f32 %v725, %v748
    %750 = vdwg.mxu0
    %vm751 = vcmask 9216
    %v752 = vsel %vm751, %v749, -inf
    %753 = vmax.xlane.f32.xlu0 %v752
    %v754 = vpop.xlane.xlu0 %753
    %v755 = vsub.f32 %v749, %v754
    %v756 = vmul.f32 %v755, 1.442695
    %v757 = vpow.pop %v756
    %v758 = vsel %vm751, %v757, 0.0
    %759 = vadd.xlane.f32.xlu0 %v758
    %v760 = vpop.xlane.xlu0 %759
    %v761 = vlog2.pop %v760
    %v762 = vmul.f32 %v761, 0.6931472
    %v763 = vadd.f32 %v754, %v762
    %v764 = vsub.f32 %v749, %v763
    %765 = vst.msk [vmem:[#allocation5] sm:$0x3] %vm751, %v764
    // Predicated region
    $region34: #{interaction_mode_net_forward.1} parent=1 // pred_check
      _
    $region35: #{interaction_mode_net_forward.1} parent=1 // pred_check_branch
      %767 = sbr.rel (0) target = $region37
    $region36: #{interaction_mode_net_forward.1} parent=1 // pred_region
      %769 = vsyncadd [#allocation4], 0
      %s771 = sshll.u32 [#allocation5], 4
      %s772 = int_to_ptr.vmem [resolvable:$true] %s771
      %s773 = sshll.u32 %s7, 4
      %s774 = int_to_ptr.hbm [resolvable:$true] %s773
      %776 = dma.vmem_to_hbm [thread:$0]  %s772, 32, %s774, [#allocation4]
    $region37: #{interaction_mode_net_forward.1} parent=1 // pred_fallthru
      _
    // Predicated region
    $region38: #{interaction_mode_net_forward.1} parent=1 // pred_check
      _
    $region39: #{interaction_mode_net_forward.1} parent=1 // pred_check_branch
      %778 = sbr.rel (0) target = $region41
    $region40: #{interaction_mode_net_forward.1} parent=1 // pred_region
      %780 = dma.done [#allocation4], 32
    $region41: #{interaction_mode_net_forward.1} parent=1 // pred_fallthru
      _
    %781 = vsyncpa [#allocation3], 1
    %782 = vsyncpa [#allocation4], 1

</llo_original>
